<compile_context>
chip_gen: v5e
topology: v5e:2x2
jax: 0.10.0
libtpu: 0.0.40
codegen_flags: <defaults>
</compile_context>

<pallas_src>
import functools

import jax
import jax.numpy as jnp
from jax.experimental import pallas as pl
from jax.experimental.pallas import tpu as pltpu


_DEFAULT_MAX_TILE_ROWS = 1024          # rows per batch tile (multiple of 8)
_PER_BUFFER_VMEM_BUDGET = 4 * 1024 * 1024  # bytes per x tile (x2 for double buffer)


def _round_up(n: int, m: int) -> int:
    return ((n + m - 1) // m) * m


def _simplest_nn_kernel(x_ref, w_ref, b_ref, o_ref, *, activation: str):
    # x_ref: (TB, D) VMEM, w_ref: (1, D) VMEM (lane-dense), b_ref: (1, 1) SMEM,
    # o_ref: (TB, 1) VMEM.
    x = x_ref[...]
    w = w_ref[...]
    # VPU broadcast-multiply + XLU lane reduction (avoids an N=1 MXU matmul).
    z = jnp.sum(x * w, axis=-1, keepdims=True) + b_ref[0, 0]
    if activation == "relu":
        z = jnp.maximum(z, 0.0)
    elif activation == "sigmoid":
        z = jax.nn.sigmoid(z)
    elif activation == "tanh":
        z = jnp.tanh(z)
    else:
        raise ValueError(f"unknown activation: {activation}")
    o_ref[...] = z.astype(o_ref.dtype)


def simplest_nn_forward(x, w, b, *, activation: str = "relu",
                        max_tile_rows: int = _DEFAULT_MAX_TILE_ROWS):
    """x: (B, D) f32, w: (1, D) f32 (PyTorch nn.Linear weight layout),
    b: (1,) or (1, 1) f32  ->  (B, 1) f32, matching activation(x @ w.T + b)."""
    B, D = x.shape
    assert w.shape == (1, D), f"expected weight shape (1, {D}), got {w.shape}"
    x = x.astype(jnp.float32)
    w = w.astype(jnp.float32)
    b = jnp.reshape(b, (1, 1)).astype(jnp.float32)

    # --- choose batch tile (multiple of 8, VMEM-budget capped) -----------------
    rows_budget = max(8, (_PER_BUFFER_VMEM_BUDGET // (D * 4)) // 8 * 8)
    tb = min(max(8, (max_tile_rows // 8) * 8), rows_budget)
    bp = _round_up(max(B, 1), 8)
    tb = min(tb, bp)
    bp = _round_up(bp, tb)

    x_p = x if bp == B else jnp.pad(x, ((0, bp - B), (0, 0)))
    grid = (bp // tb,)

    kernel = functools.partial(_simplest_nn_kernel, activation=activation)

    out = pl.pallas_call(
        kernel,
        out_shape=jax.ShapeDtypeStruct((bp, 1), jnp.float32),
        grid=grid,
        in_specs=[
            pl.BlockSpec((tb, D), lambda i: (i, 0)),                 # x tile
            pl.BlockSpec((1, D), lambda i: (0, 0)),                  # weight row
            pl.BlockSpec(memory_space=pltpu.MemorySpace.SMEM),       # bias scalar
        ],
        out_specs=pl.BlockSpec((tb, 1), lambda i: (i, 0)),
        compiler_params=pltpu.CompilerParams(
            dimension_semantics=("parallel",),                       # shards on v7x 2-TC
        ),
        cost_estimate=pl.CostEstimate(
            flops=2 * bp * D,
            transcendentals=bp if activation in ("sigmoid", "tanh") else 0,
            bytes_accessed=bp * D * 4 + D * 4 + 4 + bp * 4,
        ),
    )(x_p, w, b)

    return out[:B]


def _reference(x, w, b, activation: str):
    z = x @ w.T + jnp.reshape(b, (1, 1))
    if activation == "relu":
        return jnp.maximum(z, 0.0)
    if activation == "sigmoid":
        return jax.nn.sigmoid(z)
    if activation == "tanh":
        return jnp.tanh(z)
    raise ValueError(activation)


if __name__ == "__main__":
    key = jax.random.PRNGKey(0)
    kx, kw, kb, kx2 = jax.random.split(key, 4)

    B = 8      # batch
    D = 32     # input_size (== nn.Linear in_features)

    x = jax.random.normal(kx, (B, D), dtype=jnp.float32)
    # Deterministic parameter init (mimics Linear(in=D, out=1)); weight kept in
    # PyTorch layout (out_features, in_features) = (1, D).
    bound = 1.0 / (D ** 0.5)
    w = jax.random.uniform(kw, (1, D), dtype=jnp.float32, minval=-bound, maxval=bound)
    b = jax.random.uniform(kb, (1, 1), dtype=jnp.float32, minval=-bound, maxval=bound)

    out = simplest_nn_forward(x, w, b, activation="relu")
    out = jax.block_until_ready(out)
    ref = _reference(x, w, b, "relu")
    assert out.shape == (B, 1)
    assert jnp.allclose(out, ref, atol=1e-5, rtol=1e-5), "mismatch vs reference (single tile)"

    # Second check: exercise multi-tile grid + batch padding path.
    B2 = 100
    x2 = jax.random.normal(kx2, (B2, D), dtype=jnp.float32)
    out2 = simplest_nn_forward(x2, w, b, activation="relu", max_tile_rows=32)
    out2 = jax.block_until_ready(out2)
    ref2 = _reference(x2, w, b, "relu")
    assert out2.shape == (B2, 1)
    assert jnp.allclose(out2, ref2, atol=1e-5, rtol=1e-5), "mismatch vs reference (tiled)"

    print("KERNEL_OK")
</pallas_src>

<mosaic_0001>
module attributes {stable_mosaic.version = 11 : i64} {
  func.func @_simplest_nn_kernel(%arg0: i32, %arg1: memref<8x32xf32, #tpu.memory_space<vmem>>, %arg2: memref<1x32xf32, #tpu.memory_space<vmem>>, %arg3: memref<1x1xf32, #tpu.memory_space<smem>>, %arg4: memref<8x1xf32, #tpu.memory_space<vmem>>) attributes {dimension_semantics = [#tpu.dimension_semantics<parallel>], iteration_bounds = array<i64: 1>, scalar_prefetch = 0 : i64, scratch_operands = 0 : i64, tpu.core_type = #tpu.core_type<tc>, window_params = [{transform_indices = @transform_0, window_bounds = array<i64: 8, 32>}, {pipeline_mode = #tpu.pipeline_mode<synchronous>, transform_indices = @transform_1, window_bounds = array<i64: 1, 32>}, {transform_indices = @transform_2, window_bounds = array<i64: 1, 1>}, {transform_indices = @transform_3, window_bounds = array<i64: 8, 1>}]} {
    %c0 = arith.constant 0 : index
    %c0_0 = arith.constant 0 : index
    %0 = vector.load %arg1[%c0, %c0_0] : memref<8x32xf32, #tpu.memory_space<vmem>>, vector<8x32xf32>
    %c0_1 = arith.constant 0 : index
    %c0_2 = arith.constant 0 : index
    %1 = vector.load %arg2[%c0_1, %c0_2] : memref<1x32xf32, #tpu.memory_space<vmem>>, vector<1x32xf32>
    %2 = vector.broadcast %1 : vector<1x32xf32> to vector<8x32xf32>
    %3 = arith.mulf %0, %2 : vector<8x32xf32>
    %cst = arith.constant dense<0.000000e+00> : vector<8xf32>
    %4 = vector.multi_reduction <add>, %3, %cst [1] : vector<8x32xf32> to vector<8xf32>
    %5 = vector.shape_cast %4 : vector<8xf32> to vector<8x1xf32>
    %c0_3 = arith.constant 0 : index
    %c0_4 = arith.constant 0 : index
    %6 = memref.load %arg3[%c0_3, %c0_4] : memref<1x1xf32, #tpu.memory_space<smem>>
    %7 = vector.broadcast %6 : f32 to vector<8x1xf32>
    %8 = arith.addf %5, %7 : vector<8x1xf32>
    %cst_5 = arith.constant 0.000000e+00 : f32
    %9 = vector.broadcast %cst_5 : f32 to vector<8x1xf32>
    %10 = arith.maximumf %8, %9 : vector<8x1xf32>
    %c0_6 = arith.constant 0 : index
    %c0_7 = arith.constant 0 : index
    %11 = vector.load %arg4[%c0_6, %c0_7] : memref<8x1xf32, #tpu.memory_space<vmem>>, vector<8x1xf32>
    tpu.vector_store %arg4[%c0_6, %c0_7], %10 {strides = array<i32>} : memref<8x1xf32, #tpu.memory_space<vmem>>, vector<8x1xf32>,
    return
  }
  func.func @transform_0(%arg0: i32) -> (i32, i32) {
    %c0_i32 = arith.constant 0 : i32
    %c0_i32_0 = arith.constant 0 : i32
    return %arg0, %c0_i32 : i32, i32
  }
  func.func @transform_1(%arg0: i32) -> (i32, i32) {
    %c0_i32 = arith.constant 0 : i32
    %c0_i32_0 = arith.constant 0 : i32
    %c0_i32_1 = arith.constant 0 : i32
    return %c0_i32, %c0_i32_0 : i32, i32
  }
  func.func @transform_2(%arg0: i32) -> (i32, i32) {
    %c0_i32 = arith.constant 0 : i32
    %c0_i32_0 = arith.constant 0 : i32
    %c0_i32_1 = arith.constant 0 : i32
    return %c0_i32, %c0_i32_0 : i32, i32
  }
  func.func @transform_3(%arg0: i32) -> (i32, i32) {
    %c0_i32 = arith.constant 0 : i32
    %c0_i32_0 = arith.constant 0 : i32
    return %arg0, %c0_i32 : i32, i32
  }
}

</mosaic_0001>

<llo_original>
// kernel: tpu_custom_call.1
$region0: #{tpu_custom_call.1}
  #allocation0 [shape = 'u32[]', space=smem, size = 0x4, offset = 0x4, fixed_abs, tag = 'smem constant byte address 0x4 - core index']
  #allocation1 [shape = 'u32[72,128]{1,0:T(1,128)}', space=vmem, size = 0x9000, scoped, tag = 'internal scratch']
  #allocation2 [shape = 'f32[1,1]{1,0:T(1,128)S(6)}', space=smem, size = 0x200, scoped, tag = 'scoped memory for tpu_custom_call.1']
  %s0 = inlined_call_operand.hbm [shape: f32[8,32], index: 0, kind: input, shape index: {}]
  %s1 = inlined_call_operand.vmem [shape: f32[1,32], index: 1, kind: input, shape index: {}]
  %s2 = inlined_call_operand.<no memory space> [shape: f32[1,1], index: 2, kind: input, shape index: {}]
  %s3 = inlined_call_operand.vmem [shape: f32[8,1], index: 3, kind: output, shape index: {}]
  %s4 = sld [smem:[#allocation0]]
  $region26: #{tpu_custom_call.1} parent=0
    _
  %s6 = ssub.s32 1, %s4
  %s7 = scalar_select 0, %s6, %s4
  %8 = sst [smem:[#allocation2]] %s2
  $region1: #{tpu_custom_call.1} parent=0
    #allocation3 [shape = 'u8[4096]{0}', space=vmem, size = 0x1000, scoped, tag = 'input window, operand 0, single buffered']
    #allocation4 [shape = 's32[1]{0}', space=sflag, size = 0x4, scoped, tag = 'scoped memory for tpu_custom_call.1']
    %9 = vsyncpa [#allocation4], 0
    // Predicated region
    $region2: #{tpu_custom_call.1} parent=1 // pred_check
      _
    $region3: #{tpu_custom_call.1} parent=1 // pred_check_branch
      %11 = sbr.rel (0) target = $region5
    $region4: #{tpu_custom_call.1} parent=1 // pred_region
      %13 = vsyncadd [#allocation4], 0
      %s15 = sshll.u32 %s0, 4
      %s16 = int_to_ptr.hbm [resolvable:$true] %s15
      %s17 = sshll.u32 [#allocation3], 4
      %s18 = int_to_ptr.vmem [resolvable:$true] %s17
      %20 = dma.hbm_to_vmem [thread:$0]  %s16, 128, %s18, [#allocation4]
    $region5: #{tpu_custom_call.1} parent=1 // pred_fallthru
      _
    // Predicated region
    $region6: #{tpu_custom_call.1} parent=1 // pred_check
      _
    $region7: #{tpu_custom_call.1} parent=1 // pred_check_branch
      %22 = sbr.rel (0) target = $region9
    $region8: #{tpu_custom_call.1} parent=1 // pred_region
      _
    $region9: #{tpu_custom_call.1} parent=1 // pred_fallthru
      _
    // Predicated region
    $region10: #{tpu_custom_call.1} parent=1 // pred_check
      _
    $region11: #{tpu_custom_call.1} parent=1 // pred_check_branch
      %24 = sbr.rel (0) target = $region13
    $region12: #{tpu_custom_call.1} parent=1 // pred_region
      _
    $region13: #{tpu_custom_call.1} parent=1 // pred_fallthru
      _
    // Predicated region
    $region14: #{tpu_custom_call.1} parent=1 // pred_check
      _
    $region15: #{tpu_custom_call.1} parent=1 // pred_check_branch
      %26 = sbr.rel (0) target = $region17
    $region16: #{tpu_custom_call.1} parent=1 // pred_region
      %28 = dma.done [#allocation4], 128
    $region17: #{tpu_custom_call.1} parent=1 // pred_fallthru
      _
    %v29 = vld [vmem:[#allocation3] sm:$0xff]
    %v30 = vld [vmem:[%s1] sm:$0x1]
    %v32 = vperm.slane %v30, 0
    %v34 = vmul.f32 %v29, %v32
    %vm35 = vcmask 261120
    %v36 = vsel %vm35, %v34, 0.0
    %37 = vadd.xlane.f32.xlu0 %v36
    %v38 = vpop.xlane.xlu0 %37
    %s39 = sld [smem:[#allocation2]]
    %v40 = vstv %s39
    %v41 = vadd.f32 %v38, %v40
    %v42 = vmax.f32 %v41, 0.0
    %vm43 = vcmask 7168
    %44 = vst.msk [vmem:[%s3] sm:$0xff] %vm43, %v42
    // Predicated region
    $region18: #{tpu_custom_call.1} parent=1 // pred_check
      _
    $region19: #{tpu_custom_call.1} parent=1 // pred_check_branch
      %46 = sbr.rel (0) target = $region21
    $region20: #{tpu_custom_call.1} parent=1 // pred_region
      _
    $region21: #{tpu_custom_call.1} parent=1 // pred_fallthru
      _
    // Predicated region
    $region22: #{tpu_custom_call.1} parent=1 // pred_check
      _
    $region23: #{tpu_custom_call.1} parent=1 // pred_check_branch
      %48 = sbr.rel (0) target = $region25
    $region24: #{tpu_custom_call.1} parent=1 // pred_region
      _
    $region25: #{tpu_custom_call.1} parent=1 // pred_fallthru
      _
    %49 = vsyncpa [#allocation4], 1

</llo_original>
